<compile_context>
chip_gen: v7x
topology: tpu7x:2x2x1
jax: 0.10.0
libtpu: 0.0.40
codegen_flags: <defaults>
</compile_context>

<pallas_src>
import jax
import jax.numpy as jnp
from jax import lax
from jax.experimental import pallas as pl
from jax.experimental.pallas import tpu as pltpu


def rnn_fused_kernel(x_ref, wih_ref, whh_ref, brnn_ref, w1_ref, b1_ref, w2_ref, b2_ref,
                     out_ref, hfin_ref, hs_ref):
    """Single-shot kernel.

    x_ref   : (T*B, I)  inputs, rows ordered (t, b)  [time-major]
    wih_ref : (I, H)    W_ih^T
    whh_ref : (H, H)    W_hh^T
    brnn_ref: (1, H)    b_ih + b_hh (pre-summed)
    w1_ref  : (H, H)    W_fc1^T
    b1_ref  : (1, H)
    w2_ref  : (1, H)    W_fc (already a row)
    b2_ref  : (1, 1)
    out_ref : (1, T*B)  sigmoid head output, lane-oriented, rows ordered (t, b)
    hfin_ref: (B, H)    final hidden state
    hs_ref  : (T*B, H)  VMEM scratch: holds xproj, then gets overwritten with h_t
    """
    TB = x_ref.shape[0]
    B, H = hfin_ref.shape
    T = TB // B

    # ---- prologue: input projection for ALL time steps in one matmul (+ biases) ----
    hs_ref[...] = (jnp.dot(x_ref[...], wih_ref[...], preferred_element_type=jnp.float32)
                   + brnn_ref[...])

    # ---- serial recurrence, fully unrolled (T static & small); static ref slices ----
    whh = whh_ref[...]                       # hoisted load, reused every step

    # t = 0: h_prev == 0, so the recurrent matmul is skipped.
    h = jnp.tanh(hs_ref[pl.ds(0, B), :])
    hs_ref[pl.ds(0, B), :] = h

    for t in range(1, T):
        rows = pl.ds(t * B, B)
        h = jnp.tanh(hs_ref[rows, :]
                     + jnp.dot(h, whh, preferred_element_type=jnp.float32))
        hs_ref[rows, :] = h

    # final hidden state written exactly once
    hfin_ref[...] = h

    # ---- MLP head applied once to all T*B rows ----
    z = jnp.maximum(hs_ref[...], 0.0)                                   # ReLU(rnn out)
    z = jnp.dot(z, w1_ref[...], preferred_element_type=jnp.float32) + b1_ref[...]
    z = jnp.maximum(z, 0.0)                                             # ReLU
    # fc: contract H against H -> (1, T*B) lane-oriented row (no lane-width-1 store)
    y = lax.dot_general(w2_ref[...], z, (((1,), (1,)), ((), ())),
                        preferred_element_type=jnp.float32) + b2_ref[...]
    out_ref[...] = jax.nn.sigmoid(y)


@jax.jit
def vanilla_rnn_forward(x, params):
    """x: (B, T, I) float32. Returns (out (B*T, 1), hidden (1, B, H)) like PyTorch."""
    B, T, I = x.shape
    H = params["w_hh"].shape[0]

    # layout plumbing (XLA): time-major flattened inputs, pre-transposed weights,
    # pre-summed RNN biases.
    x_flat = jnp.transpose(x, (1, 0, 2)).reshape(T * B, I)   # rows ordered (t, b)
    wih_t = params["w_ih"].T                                 # (I, H)
    whh_t = params["w_hh"].T                                 # (H, H)
    brnn = (params["b_ih"] + params["b_hh"]).reshape(1, H)   # pre-summed bias
    w1_t = params["w_fc1"].T                                 # (H, H)
    b1 = params["b_fc1"].reshape(1, H)
    w2 = params["w_fc"].reshape(1, H)                        # fc weight as a row
    b2 = params["b_fc"].reshape(1, 1)

    vmem_spec = pl.BlockSpec(memory_space=pltpu.MemorySpace.VMEM)

    out_row, h_final = pl.pallas_call(
        rnn_fused_kernel,
        out_shape=(jax.ShapeDtypeStruct((1, T * B), jnp.float32),
                   jax.ShapeDtypeStruct((B, H), jnp.float32)),
        in_specs=[vmem_spec] * 8,
        out_specs=(vmem_spec, vmem_spec),
        scratch_shapes=[pltpu.VMEM((T * B, H), jnp.float32)],   # hidden-state stash
    )(x_flat, wih_t, whh_t, brnn, w1_t, b1, w2, b2)

    # PyTorch: out.view(-1, H) on a batch_first output => rows ordered (b, t).
    # out_row columns are ordered (t, b): (1, T*B) -> (T, B) -> (B, T) -> (B*T, 1)
    out = out_row.reshape(T, B).transpose(1, 0).reshape(B * T, 1)
    hidden = h_final.reshape(1, B, H)
    return out, hidden


def reference_forward(x, params):
    """Pure-JAX reference mirroring the PyTorch module."""
    B, T, _ = x.shape
    H = params["w_hh"].shape[0]
    h = jnp.zeros((B, H), jnp.float32)
    hs = []
    for t in range(T):
        h = jnp.tanh(x[:, t, :] @ params["w_ih"].T + params["b_ih"]
                     + h @ params["w_hh"].T + params["b_hh"])
        hs.append(h)
    out = jnp.stack(hs, axis=1).reshape(B * T, H)
    out = jnp.maximum(out, 0.0)
    out = jnp.maximum(out @ params["w_fc1"].T + params["b_fc1"], 0.0)
    out = out @ params["w_fc"].T + params["b_fc"]
    out = jax.nn.sigmoid(out)
    return out, h.reshape(1, B, H)


def init_params(key, input_size=6, hidden_dim=64):
    """Deterministic init mimicking PyTorch's uniform(-1/sqrt(H), 1/sqrt(H))."""
    ks = jax.random.split(key, 8)
    bound = 1.0 / jnp.sqrt(hidden_dim)

    def u(k, shape):
        return jax.random.uniform(k, shape, jnp.float32, -bound, bound)

    return {
        "w_ih": u(ks[0], (hidden_dim, input_size)),   # weight_ih_l0
        "w_hh": u(ks[1], (hidden_dim, hidden_dim)),   # weight_hh_l0
        "b_ih": u(ks[2], (hidden_dim,)),
        "b_hh": u(ks[3], (hidden_dim,)),
        "w_fc1": u(ks[4], (hidden_dim, hidden_dim)),  # fc1
        "b_fc1": u(ks[5], (hidden_dim,)),
        "w_fc": u(ks[6], (1, hidden_dim)),            # fc
        "b_fc": u(ks[7], (1,)),
    }


if __name__ == "__main__":
    key = jax.random.PRNGKey(0)
    pkey, xkey = jax.random.split(key)

    B, T, I, H = 2, 8, 6, 64
    # NOTE: at B=2 most of each (8,128) vreg is padding; if the real workload allows,
    # run with B a multiple of 8 (and on v7x, shard batch across the 2 TensorCores).
    params = init_params(pkey, input_size=I, hidden_dim=H)
    x = jax.random.normal(xkey, (B, T, I), jnp.float32)

    out, hidden = vanilla_rnn_forward(x, params)
    out = jax.block_until_ready(out)
    hidden = jax.block_until_ready(hidden)

    out_ref, hidden_ref = reference_forward(x, params)
    assert out.shape == (B * T, 1) and hidden.shape == (1, B, H)
    assert jnp.allclose(out, out_ref, atol=1e-5, rtol=1e-5), "output mismatch"
    assert jnp.allclose(hidden, hidden_ref, atol=1e-5, rtol=1e-5), "hidden mismatch"

    print("KERNEL_OK")
</pallas_src>

<mosaic_0001>
module attributes {stable_mosaic.version = 11 : i64} {
  func.func @rnn_fused_kernel(%arg0: memref<16x6xf32, #tpu.memory_space<vmem>>, %arg1: memref<6x64xf32, #tpu.memory_space<vmem>>, %arg2: memref<64x64xf32, #tpu.memory_space<vmem>>, %arg3: memref<1x64xf32, #tpu.memory_space<vmem>>, %arg4: memref<64x64xf32, #tpu.memory_space<vmem>>, %arg5: memref<1x64xf32, #tpu.memory_space<vmem>>, %arg6: memref<1x64xf32, #tpu.memory_space<vmem>>, %arg7: memref<1x1xf32, #tpu.memory_space<vmem>>, %arg8: memref<1x16xf32, #tpu.memory_space<vmem>>, %arg9: memref<2x64xf32, #tpu.memory_space<vmem>>, %arg10: memref<16x64xf32, #tpu.memory_space<vmem>>) attributes {dimension_semantics = [], scalar_prefetch = 0 : i64, scratch_operands = 1 : i64, tpu.core_type = #tpu.core_type<tc>} {
    %c0 = arith.constant 0 : index
    %c0_0 = arith.constant 0 : index
    %0 = vector.load %arg0[%c0, %c0_0] : memref<16x6xf32, #tpu.memory_space<vmem>>, vector<16x6xf32>
    %c0_1 = arith.constant 0 : index
    %c0_2 = arith.constant 0 : index
    %1 = vector.load %arg1[%c0_1, %c0_2] : memref<6x64xf32, #tpu.memory_space<vmem>>, vector<6x64xf32>
    %cst = arith.constant dense<0.000000e+00> : vector<16x64xf32>
    %2 = tpu.matmul %0, %1, %cst {dimension_numbers = #tpu.dot_dimension_numbers<[1], [0], [0], [1], [0, 0, 1, 1], [], []>} : vector<16x6xf32>, vector<6x64xf32>, vector<16x64xf32> -> vector<16x64xf32>
    %c0_3 = arith.constant 0 : index
    %c0_4 = arith.constant 0 : index
    %3 = vector.load %arg3[%c0_3, %c0_4] : memref<1x64xf32, #tpu.memory_space<vmem>>, vector<1x64xf32>
    %4 = vector.broadcast %3 : vector<1x64xf32> to vector<16x64xf32>
    %5 = arith.addf %2, %4 : vector<16x64xf32>
    %c0_5 = arith.constant 0 : index
    %c0_6 = arith.constant 0 : index
    %6 = vector.load %arg10[%c0_5, %c0_6] : memref<16x64xf32, #tpu.memory_space<vmem>>, vector<16x64xf32>
    tpu.vector_store %arg10[%c0_5, %c0_6], %5 {strides = array<i32>} : memref<16x64xf32, #tpu.memory_space<vmem>>, vector<16x64xf32>,
    %c0_7 = arith.constant 0 : index
    %c0_8 = arith.constant 0 : index
    %7 = vector.load %arg2[%c0_7, %c0_8] : memref<64x64xf32, #tpu.memory_space<vmem>>, vector<64x64xf32>
    %c0_9 = arith.constant 0 : index
    %c0_10 = arith.constant 0 : index
    %8 = vector.load %arg10[%c0_9, %c0_10] : memref<16x64xf32, #tpu.memory_space<vmem>>, vector<2x64xf32>
    %9 = math.tanh %8 : vector<2x64xf32>
    %c0_11 = arith.constant 0 : index
    %c0_12 = arith.constant 0 : index
    %10 = vector.load %arg10[%c0_11, %c0_12] : memref<16x64xf32, #tpu.memory_space<vmem>>, vector<2x64xf32>
    tpu.vector_store %arg10[%c0_11, %c0_12], %9 {strides = array<i32>} : memref<16x64xf32, #tpu.memory_space<vmem>>, vector<2x64xf32>,
    %c2 = arith.constant 2 : index
    %c0_13 = arith.constant 0 : index
    %11 = vector.load %arg10[%c2, %c0_13] : memref<16x64xf32, #tpu.memory_space<vmem>>, vector<2x64xf32>
    %cst_14 = arith.constant dense<0.000000e+00> : vector<2x64xf32>
    %12 = tpu.matmul %9, %7, %cst_14 {dimension_numbers = #tpu.dot_dimension_numbers<[1], [0], [0], [1], [0, 0, 1, 1], [], []>} : vector<2x64xf32>, vector<64x64xf32>, vector<2x64xf32> -> vector<2x64xf32>
    %13 = arith.addf %11, %12 : vector<2x64xf32>
    %14 = math.tanh %13 : vector<2x64xf32>
    %c2_15 = arith.constant 2 : index
    %c0_16 = arith.constant 0 : index
    %15 = vector.load %arg10[%c2_15, %c0_16] : memref<16x64xf32, #tpu.memory_space<vmem>>, vector<2x64xf32>
    tpu.vector_store %arg10[%c2_15, %c0_16], %14 {strides = array<i32>} : memref<16x64xf32, #tpu.memory_space<vmem>>, vector<2x64xf32>,
    %c4 = arith.constant 4 : index
    %c0_17 = arith.constant 0 : index
    %16 = vector.load %arg10[%c4, %c0_17] : memref<16x64xf32, #tpu.memory_space<vmem>>, vector<2x64xf32>
    %cst_18 = arith.constant dense<0.000000e+00> : vector<2x64xf32>
    %17 = tpu.matmul %14, %7, %cst_18 {dimension_numbers = #tpu.dot_dimension_numbers<[1], [0], [0], [1], [0, 0, 1, 1], [], []>} : vector<2x64xf32>, vector<64x64xf32>, vector<2x64xf32> -> vector<2x64xf32>
    %18 = arith.addf %16, %17 : vector<2x64xf32>
    %19 = math.tanh %18 : vector<2x64xf32>
    %c4_19 = arith.constant 4 : index
    %c0_20 = arith.constant 0 : index
    %20 = vector.load %arg10[%c4_19, %c0_20] : memref<16x64xf32, #tpu.memory_space<vmem>>, vector<2x64xf32>
    tpu.vector_store %arg10[%c4_19, %c0_20], %19 {strides = array<i32>} : memref<16x64xf32, #tpu.memory_space<vmem>>, vector<2x64xf32>,
    %c6 = arith.constant 6 : index
    %c0_21 = arith.constant 0 : index
    %21 = vector.load %arg10[%c6, %c0_21] : memref<16x64xf32, #tpu.memory_space<vmem>>, vector<2x64xf32>
    %cst_22 = arith.constant dense<0.000000e+00> : vector<2x64xf32>
    %22 = tpu.matmul %19, %7, %cst_22 {dimension_numbers = #tpu.dot_dimension_numbers<[1], [0], [0], [1], [0, 0, 1, 1], [], []>} : vector<2x64xf32>, vector<64x64xf32>, vector<2x64xf32> -> vector<2x64xf32>
    %23 = arith.addf %21, %22 : vector<2x64xf32>
    %24 = math.tanh %23 : vector<2x64xf32>
    %c6_23 = arith.constant 6 : index
    %c0_24 = arith.constant 0 : index
    %25 = vector.load %arg10[%c6_23, %c0_24] : memref<16x64xf32, #tpu.memory_space<vmem>>, vector<2x64xf32>
    tpu.vector_store %arg10[%c6_23, %c0_24], %24 {strides = array<i32>} : memref<16x64xf32, #tpu.memory_space<vmem>>, vector<2x64xf32>,
    %c8 = arith.constant 8 : index
    %c0_25 = arith.constant 0 : index
    %26 = vector.load %arg10[%c8, %c0_25] : memref<16x64xf32, #tpu.memory_space<vmem>>, vector<2x64xf32>
    %cst_26 = arith.constant dense<0.000000e+00> : vector<2x64xf32>
    %27 = tpu.matmul %24, %7, %cst_26 {dimension_numbers = #tpu.dot_dimension_numbers<[1], [0], [0], [1], [0, 0, 1, 1], [], []>} : vector<2x64xf32>, vector<64x64xf32>, vector<2x64xf32> -> vector<2x64xf32>
    %28 = arith.addf %26, %27 : vector<2x64xf32>
    %29 = math.tanh %28 : vector<2x64xf32>
    %c8_27 = arith.constant 8 : index
    %c0_28 = arith.constant 0 : index
    %30 = vector.load %arg10[%c8_27, %c0_28] : memref<16x64xf32, #tpu.memory_space<vmem>>, vector<2x64xf32>
    tpu.vector_store %arg10[%c8_27, %c0_28], %29 {strides = array<i32>} : memref<16x64xf32, #tpu.memory_space<vmem>>, vector<2x64xf32>,
    %c10 = arith.constant 10 : index
    %c0_29 = arith.constant 0 : index
    %31 = vector.load %arg10[%c10, %c0_29] : memref<16x64xf32, #tpu.memory_space<vmem>>, vector<2x64xf32>
    %cst_30 = arith.constant dense<0.000000e+00> : vector<2x64xf32>
    %32 = tpu.matmul %29, %7, %cst_30 {dimension_numbers = #tpu.dot_dimension_numbers<[1], [0], [0], [1], [0, 0, 1, 1], [], []>} : vector<2x64xf32>, vector<64x64xf32>, vector<2x64xf32> -> vector<2x64xf32>
    %33 = arith.addf %31, %32 : vector<2x64xf32>
    %34 = math.tanh %33 : vector<2x64xf32>
    %c10_31 = arith.constant 10 : index
    %c0_32 = arith.constant 0 : index
    %35 = vector.load %arg10[%c10_31, %c0_32] : memref<16x64xf32, #tpu.memory_space<vmem>>, vector<2x64xf32>
    tpu.vector_store %arg10[%c10_31, %c0_32], %34 {strides = array<i32>} : memref<16x64xf32, #tpu.memory_space<vmem>>, vector<2x64xf32>,
    %c12 = arith.constant 12 : index
    %c0_33 = arith.constant 0 : index
    %36 = vector.load %arg10[%c12, %c0_33] : memref<16x64xf32, #tpu.memory_space<vmem>>, vector<2x64xf32>
    %cst_34 = arith.constant dense<0.000000e+00> : vector<2x64xf32>
    %37 = tpu.matmul %34, %7, %cst_34 {dimension_numbers = #tpu.dot_dimension_numbers<[1], [0], [0], [1], [0, 0, 1, 1], [], []>} : vector<2x64xf32>, vector<64x64xf32>, vector<2x64xf32> -> vector<2x64xf32>
    %38 = arith.addf %36, %37 : vector<2x64xf32>
    %39 = math.tanh %38 : vector<2x64xf32>
    %c12_35 = arith.constant 12 : index
    %c0_36 = arith.constant 0 : index
    %40 = vector.load %arg10[%c12_35, %c0_36] : memref<16x64xf32, #tpu.memory_space<vmem>>, vector<2x64xf32>
    tpu.vector_store %arg10[%c12_35, %c0_36], %39 {strides = array<i32>} : memref<16x64xf32, #tpu.memory_space<vmem>>, vector<2x64xf32>,
    %c14 = arith.constant 14 : index
    %c0_37 = arith.constant 0 : index
    %41 = vector.load %arg10[%c14, %c0_37] : memref<16x64xf32, #tpu.memory_space<vmem>>, vector<2x64xf32>
    %cst_38 = arith.constant dense<0.000000e+00> : vector<2x64xf32>
    %42 = tpu.matmul %39, %7, %cst_38 {dimension_numbers = #tpu.dot_dimension_numbers<[1], [0], [0], [1], [0, 0, 1, 1], [], []>} : vector<2x64xf32>, vector<64x64xf32>, vector<2x64xf32> -> vector<2x64xf32>
    %43 = arith.addf %41, %42 : vector<2x64xf32>
    %44 = math.tanh %43 : vector<2x64xf32>
    %c14_39 = arith.constant 14 : index
    %c0_40 = arith.constant 0 : index
    %45 = vector.load %arg10[%c14_39, %c0_40] : memref<16x64xf32, #tpu.memory_space<vmem>>, vector<2x64xf32>
    tpu.vector_store %arg10[%c14_39, %c0_40], %44 {strides = array<i32>} : memref<16x64xf32, #tpu.memory_space<vmem>>, vector<2x64xf32>,
    %c0_41 = arith.constant 0 : index
    %c0_42 = arith.constant 0 : index
    %46 = vector.load %arg9[%c0_41, %c0_42] : memref<2x64xf32, #tpu.memory_space<vmem>>, vector<2x64xf32>
    tpu.vector_store %arg9[%c0_41, %c0_42], %44 {strides = array<i32>} : memref<2x64xf32, #tpu.memory_space<vmem>>, vector<2x64xf32>,
    %c0_43 = arith.constant 0 : index
    %c0_44 = arith.constant 0 : index
    %47 = vector.load %arg10[%c0_43, %c0_44] : memref<16x64xf32, #tpu.memory_space<vmem>>, vector<16x64xf32>
    %cst_45 = arith.constant 0.000000e+00 : f32
    %48 = vector.broadcast %cst_45 : f32 to vector<16x64xf32>
    %49 = arith.maximumf %47, %48 : vector<16x64xf32>
    %c0_46 = arith.constant 0 : index
    %c0_47 = arith.constant 0 : index
    %50 = vector.load %arg4[%c0_46, %c0_47] : memref<64x64xf32, #tpu.memory_space<vmem>>, vector<64x64xf32>
    %cst_48 = arith.constant dense<0.000000e+00> : vector<16x64xf32>
    %51 = tpu.matmul %49, %50, %cst_48 {dimension_numbers = #tpu.dot_dimension_numbers<[1], [0], [0], [1], [0, 0, 1, 1], [], []>} : vector<16x64xf32>, vector<64x64xf32>, vector<16x64xf32> -> vector<16x64xf32>
    %c0_49 = arith.constant 0 : index
    %c0_50 = arith.constant 0 : index
    %52 = vector.load %arg5[%c0_49, %c0_50] : memref<1x64xf32, #tpu.memory_space<vmem>>, vector<1x64xf32>
    %53 = vector.broadcast %52 : vector<1x64xf32> to vector<16x64xf32>
    %54 = arith.addf %51, %53 : vector<16x64xf32>
    %cst_51 = arith.constant 0.000000e+00 : f32
    %55 = vector.broadcast %cst_51 : f32 to vector<16x64xf32>
    %56 = arith.maximumf %54, %55 : vector<16x64xf32>
    %c0_52 = arith.constant 0 : index
    %c0_53 = arith.constant 0 : index
    %57 = vector.load %arg6[%c0_52, %c0_53] : memref<1x64xf32, #tpu.memory_space<vmem>>, vector<1x64xf32>
    %cst_54 = arith.constant dense<0.000000e+00> : vector<1x16xf32>
    %58 = tpu.matmul %57, %56, %cst_54 {dimension_numbers = #tpu.dot_dimension_numbers<[1], [1], [0], [0], [0, 0, 1, 0], [], []>} : vector<1x64xf32>, vector<16x64xf32>, vector<1x16xf32> -> vector<1x16xf32>
    %c0_55 = arith.constant 0 : index
    %c0_56 = arith.constant 0 : index
    %59 = vector.load %arg7[%c0_55, %c0_56] : memref<1x1xf32, #tpu.memory_space<vmem>>, vector<1x1xf32>
    %60 = vector.broadcast %59 : vector<1x1xf32> to vector<1x16xf32>
    %61 = arith.addf %58, %60 : vector<1x16xf32>
    %62 = arith.negf %61 : vector<1x16xf32>
    %63 = math.exp %62 : vector<1x16xf32>
    %cst_57 = arith.constant 1.000000e+00 : f32
    %64 = vector.broadcast %cst_57 : f32 to vector<1x16xf32>
    %65 = arith.addf %64, %63 : vector<1x16xf32>
    %66 = arith.divf %64, %65 : vector<1x16xf32>
    %c0_58 = arith.constant 0 : index
    %c0_59 = arith.constant 0 : index
    %67 = vector.load %arg8[%c0_58, %c0_59] : memref<1x16xf32, #tpu.memory_space<vmem>>, vector<1x16xf32>
    tpu.vector_store %arg8[%c0_58, %c0_59], %66 {strides = array<i32>} : memref<1x16xf32, #tpu.memory_space<vmem>>, vector<1x16xf32>,
    return
  }
}

</mosaic_0001>

<llo_original>
// kernel: vanilla_rnn_forward.1
$region0: #{vanilla_rnn_forward.1}
  #allocation0 [shape = 'u32[]', space=smem, size = 0x4, offset = 0x4, fixed_abs, tag = 'smem constant byte address 0x4 - core index']
  #allocation1 [shape = 'u32[144,128]{1,0:T(1,128)}', space=vmem, size = 0x12000, scoped, tag = 'internal scratch']
  #allocation2 [shape = 'f32[16,64]{1,0:T(8,128)}', space=vmem, size = 0x2000, scoped, tag = 'scratch operand']
  #allocation3 [shape = 'f32[1,1]{1,0:T(1,128)S(1)}', space=vmem, size = 0x200, scoped, tag = 'scoped memory for vanilla_rnn_forward.1']
  %s0 = inlined_call_operand.vmem [shape: f32[16,6], index: 0, kind: input, shape index: {}]
  %s1 = inlined_call_operand.vmem [shape: f32[6,64], index: 1, kind: input, shape index: {}]
  %s2 = inlined_call_operand.vmem [shape: f32[64,64], index: 2, kind: input, shape index: {}]
  %s3 = inlined_call_operand.vmem [shape: f32[1,64], index: 3, kind: input, shape index: {}]
  %s4 = inlined_call_operand.vmem [shape: f32[64,64], index: 4, kind: input, shape index: {}]
  %s5 = inlined_call_operand.vmem [shape: f32[1,64], index: 5, kind: input, shape index: {}]
  %s6 = inlined_call_operand.vmem [shape: f32[1,64], index: 6, kind: input, shape index: {}]
  %s7 = inlined_call_operand.<no memory space> [shape: f32[1,1], index: 7, kind: input, shape index: {}]
  %s8 = inlined_call_operand.vmem [shape: f32[1,16], index: 8, kind: output, shape index: {0}]
  %s9 = inlined_call_operand.hbm [shape: f32[2,64], index: 9, kind: output, shape index: {1}]
  %10 = xla_tuple %s8, %s9
  %s11 = sld [smem:[#allocation0]]
  $region50: #{vanilla_rnn_forward.1} parent=0
    _
  %s13 = ssub.s32 1, %s11
  %s14 = scalar_select 0, %s13, %s11
  %v15 = vstv %s7
  %16 = vst [vmem:[#allocation3] sm:$0x1] %v15
  $region1: #{vanilla_rnn_forward.1} parent=0
    #allocation4 [shape = 'u8[1024]{0}', space=vmem, size = 0x400, scoped, tag = 'output window, operand 1, single buffered']
    #allocation5 [shape = 's32[1]{0}', space=sflag, size = 0x4, scoped, tag = 'scoped memory for vanilla_rnn_forward.1']
    %17 = vsyncpa [#allocation5], 0
    // Predicated region
    $region2: #{vanilla_rnn_forward.1} parent=1 // pred_check
      _
    $region3: #{vanilla_rnn_forward.1} parent=1 // pred_check_branch
      %19 = sbr.rel (0) target = $region5
    $region4: #{vanilla_rnn_forward.1} parent=1 // pred_region
      _
    $region5: #{vanilla_rnn_forward.1} parent=1 // pred_fallthru
      _
    // Predicated region
    $region6: #{vanilla_rnn_forward.1} parent=1 // pred_check
      _
    $region7: #{vanilla_rnn_forward.1} parent=1 // pred_check_branch
      %21 = sbr.rel (0) target = $region9
    $region8: #{vanilla_rnn_forward.1} parent=1 // pred_region
      _
    $region9: #{vanilla_rnn_forward.1} parent=1 // pred_fallthru
      _
    // Predicated region
    $region10: #{vanilla_rnn_forward.1} parent=1 // pred_check
      _
    $region11: #{vanilla_rnn_forward.1} parent=1 // pred_check_branch
      %23 = sbr.rel (0) target = $region13
    $region12: #{vanilla_rnn_forward.1} parent=1 // pred_region
      _
    $region13: #{vanilla_rnn_forward.1} parent=1 // pred_fallthru
      _
    // Predicated region
    $region14: #{vanilla_rnn_forward.1} parent=1 // pred_check
      _
    $region15: #{vanilla_rnn_forward.1} parent=1 // pred_check_branch
      %25 = sbr.rel (0) target = $region17
    $region16: #{vanilla_rnn_forward.1} parent=1 // pred_region
      _
    $region17: #{vanilla_rnn_forward.1} parent=1 // pred_fallthru
      _
    // Predicated region
    $region18: #{vanilla_rnn_forward.1} parent=1 // pred_check
      _
    $region19: #{vanilla_rnn_forward.1} parent=1 // pred_check_branch
      %27 = sbr.rel (0) target = $region21
    $region20: #{vanilla_rnn_forward.1} parent=1 // pred_region
      _
    $region21: #{vanilla_rnn_forward.1} parent=1 // pred_fallthru
      _
    // Predicated region
    $region22: #{vanilla_rnn_forward.1} parent=1 // pred_check
      _
    $region23: #{vanilla_rnn_forward.1} parent=1 // pred_check_branch
      %29 = sbr.rel (0) target = $region25
    $region24: #{vanilla_rnn_forward.1} parent=1 // pred_region
      _
    $region25: #{vanilla_rnn_forward.1} parent=1 // pred_fallthru
      _
    // Predicated region
    $region26: #{vanilla_rnn_forward.1} parent=1 // pred_check
      _
    $region27: #{vanilla_rnn_forward.1} parent=1 // pred_check_branch
      %31 = sbr.rel (0) target = $region29
    $region28: #{vanilla_rnn_forward.1} parent=1 // pred_region
      _
    $region29: #{vanilla_rnn_forward.1} parent=1 // pred_fallthru
      _
    // Predicated region
    $region30: #{vanilla_rnn_forward.1} parent=1 // pred_check
      _
    $region31: #{vanilla_rnn_forward.1} parent=1 // pred_check_branch
      %33 = sbr.rel (0) target = $region33
    $region32: #{vanilla_rnn_forward.1} parent=1 // pred_region
      _
    $region33: #{vanilla_rnn_forward.1} parent=1 // pred_fallthru
      _
    %v34 = vld [vmem:[%s0] sm:$0xff]
    %v35 = vld [vmem:[%s0 + $0x8] sm:$0xff]
    %v36 = vld [vmem:[%s1] sm:$0x3f]
    %v37 = vld [vmem:[%s3] sm:$0x1]
    %v39 = vlaneseq
    %v40 = vshrl.u32 %v39, 7
    %v41 = vsub.s32 0, %v40
    %v42 = vrot.slane %v37, %v41
    %vm44 = vcmask 48128
    %v46 = vsel %vm44, %v34, 0
    %v49 = vsel %vm44, %v35, 0
    %vm51 = vcmask 1045504
    %v53 = vsel %vm51, %v36, 0
    %55 = vmatprep.subr.mxu0 0.0
    %56 = vmatpush1.msra.mxu0 %v53
    %57 = vmatprep.subr.mxu0 0.0
    %58 = vmatpush1.msra.mxu0 0.0
    %59 = vmatprep.subr.mxu0 0.0
    %60 = vmatpush1.msra.mxu0 0.0
    %61 = vmatprep.subr.mxu0 0.0
    %62 = vmatpush1.msra.mxu0 0.0
    %63 = vmatprep.subr.mxu0 0.0
    %64 = vmatpush1.msra.mxu0 0.0
    %65 = vmatprep.subr.mxu0 0.0
    %66 = vmatpush1.msra.mxu0 0.0
    %67 = vmatprep.subr.mxu0 0.0
    %68 = vmatpush1.msra.mxu0 0.0
    %69 = vmatprep.subr.mxu0 0.0
    %70 = vmatpush1.msra.mxu0 0.0
    %71 = vmatprep.subr.mxu0 0.0
    %72 = vmatpush1.msra.mxu0 0.0
    %73 = vmatprep.subr.mxu0 0.0
    %74 = vmatpush1.msra.mxu0 0.0
    %75 = vmatprep.subr.mxu0 0.0
    %76 = vmatpush1.msra.mxu0 0.0
    %77 = vmatprep.subr.mxu0 0.0
    %78 = vmatpush1.msra.mxu0 0.0
    %79 = vmatprep.subr.mxu0 0.0
    %80 = vmatpush1.msra.mxu0 0.0
    %81 = vmatprep.subr.mxu0 0.0
    %82 = vmatpush1.msra.mxu0 0.0
    %83 = vmatprep.subr.mxu0 0.0
    %84 = vmatpush1.msra.mxu0 0.0
    %85 = vmatprep.subr.mxu0 0.0
    %86 = vmatpush1.msra.mxu0 0.0
    %87 = vmatprep.subr.mxu0 0.0
    %88 = vmatpush1.msra.mxu0 0.0
    %89 = vmatprep.subr.mxu0 0.0
    %90 = vmatpush1.msra.mxu0 0.0
    %91 = vmatprep.subr.mxu0 0.0
    %92 = vmatpush1.msra.mxu0 0.0
    %93 = vmatprep.subr.mxu0 0.0
    %94 = vmatpush1.msra.mxu0 0.0
    %95 = vmatprep.subr.mxu0 0.0
    %96 = vmatpush1.msra.mxu0 0.0
    %97 = vmatprep.subr.mxu0 0.0
    %98 = vmatpush1.msra.mxu0 0.0
    %99 = vmatprep.subr.mxu0 0.0
    %100 = vmatpush1.msra.mxu0 0.0
    %101 = vmatprep.subr.mxu0 0.0
    %102 = vmatpush1.msra.mxu0 0.0
    %103 = vmatprep.subr.mxu0 0.0
    %104 = vmatpush1.msra.mxu0 0.0
    %105 = vmatprep.subr.mxu0 0.0
    %106 = vmatpush1.msra.mxu0 0.0
    %107 = vmatprep.subr.mxu0 0.0
    %108 = vmatpush1.msra.mxu0 0.0
    %109 = vmatprep.subr.mxu0 0.0
    %110 = vmatpush1.msra.mxu0 0.0
    %111 = vmatprep.subr.mxu0 0.0
    %112 = vmatpush1.msra.mxu0 0.0
    %113 = vmatprep.subr.mxu0 0.0
    %114 = vmatpush1.msra.mxu0 0.0
    %115 = vmatprep.subr.mxu0 0.0
    %116 = vmatpush1.msra.mxu0 0.0
    %117 = vmatprep.subr.mxu0 0.0
    %118 = vmatpush1.msra.mxu0 0.0
    %119 = vmatprep.mubr.f32.mxu0 0.0
    %120 = vmatmul.mubr.f32.gmra.mrb[0].mxu0 %v46
    %v121 = vpop.f32.mrb[0].mxu0
    %v122 = vadd.f32 %v42, %v121
    %v123 = vpop.f32.mrb[0].mxu0
    %124 = vmatprep.mubr.f32.mxu0 0.0
    %125 = vmatmul.mubr.f32.gmra.mrb[0].mxu0 %v49
    %v126 = vpop.f32.mrb[0].mxu0
    %v127 = vadd.f32 %v42, %v126
    %v128 = vpop.f32.mrb[0].mxu0
    %129 = vdwg.mxu0
    %vm130 = vcmask 523264
    %131 = vst.msk [vmem:[#allocation2] sm:$0xff] %vm130, %v122
    %132 = vst.msk [vmem:[#allocation2 + $0x8] sm:$0xff] %vm130, %v127
    %v133 = vld [vmem:[%s2] sm:$0xff]
    %v134 = vld [vmem:[%s2 + $0x8] sm:$0xff]
    %v135 = vld [vmem:[%s2 + $0x10] sm:$0xff]
    %v136 = vld [vmem:[%s2 + $0x18] sm:$0xff]
    %v137 = vld [vmem:[%s2 + $0x20] sm:$0xff]
    %v138 = vld [vmem:[%s2 + $0x28] sm:$0xff]
    %v139 = vld [vmem:[%s2 + $0x30] sm:$0xff]
    %v140 = vld [vmem:[%s2 + $0x38] sm:$0xff]
    %v141 = vld [vmem:[#allocation2] sm:$0x3]
    %v142 = vtanh.pop %v141
    %vm143 = vcmask 517120
    %144 = vst.msk [vmem:[#allocation2] sm:$0x3] %vm143, %v142
    %v145 = vld [vmem:[#allocation2 + $0x2] sm:$0x3]
    %v147 = vsel %vm130, %v142, 0
    %149 = vmatprep.subr.mxu0 0.0
    %150 = vmatpush1.msra.mxu0 %v133
    %151 = vmatprep.subr.mxu0 0.0
    %152 = vmatpush1.msra.mxu0 %v134
    %153 = vmatprep.subr.mxu0 0.0
    %154 = vmatpush1.msra.mxu0 %v135
    %155 = vmatprep.subr.mxu0 0.0
    %156 = vmatpush1.msra.mxu0 %v136
    %157 = vmatprep.subr.mxu0 0.0
    %158 = vmatpush1.msra.mxu0 %v137
    %159 = vmatprep.subr.mxu0 0.0
    %160 = vmatpush1.msra.mxu0 %v138
    %161 = vmatprep.subr.mxu0 0.0
    %162 = vmatpush1.msra.mxu0 %v139
    %163 = vmatprep.subr.mxu0 0.0
    %164 = vmatpush1.msra.mxu0 %v140
    %165 = vmatprep.subr.mxu0 0.0
    %166 = vmatpush1.msra.mxu0 0.0
    %167 = vmatprep.subr.mxu0 0.0
    %168 = vmatpush1.msra.mxu0 0.0
    %169 = vmatprep.subr.mxu0 0.0
    %170 = vmatpush1.msra.mxu0 0.0
    %171 = vmatprep.subr.mxu0 0.0
    %172 = vmatpush1.msra.mxu0 0.0
    %173 = vmatprep.subr.mxu0 0.0
    %174 = vmatpush1.msra.mxu0 0.0
    %175 = vmatprep.subr.mxu0 0.0
    %176 = vmatpush1.msra.mxu0 0.0
    %177 = vmatprep.subr.mxu0 0.0
    %178 = vmatpush1.msra.mxu0 0.0
    %179 = vmatprep.subr.mxu0 0.0
    %180 = vmatpush1.msra.mxu0 0.0
    %181 = vmatprep.subr.mxu0 0.0
    %182 = vmatpush1.msra.mxu0 0.0
    %183 = vmatprep.subr.mxu0 0.0
    %184 = vmatpush1.msra.mxu0 0.0
    %185 = vmatprep.subr.mxu0 0.0
    %186 = vmatpush1.msra.mxu0 0.0
    %187 = vmatprep.subr.mxu0 0.0
    %188 = vmatpush1.msra.mxu0 0.0
    %189 = vmatprep.subr.mxu0 0.0
    %190 = vmatpush1.msra.mxu0 0.0
    %191 = vmatprep.subr.mxu0 0.0
    %192 = vmatpush1.msra.mxu0 0.0
    %193 = vmatprep.subr.mxu0 0.0
    %194 = vmatpush1.msra.mxu0 0.0
    %195 = vmatprep.subr.mxu0 0.0
    %196 = vmatpush1.msra.mxu0 0.0
    %197 = vmatprep.subr.mxu0 0.0
    %198 = vmatpush1.msra.mxu0 0.0
    %199 = vmatprep.subr.mxu0 0.0
    %200 = vmatpush1.msra.mxu0 0.0
    %201 = vmatprep.subr.mxu0 0.0
    %202 = vmatpush1.msra.mxu0 0.0
    %203 = vmatprep.subr.mxu0 0.0
    %204 = vmatpush1.msra.mxu0 0.0
    %205 = vmatprep.subr.mxu0 0.0
    %206 = vmatpush1.msra.mxu0 0.0
    %207 = vmatprep.subr.mxu0 0.0
    %208 = vmatpush1.msra.mxu0 0.0
    %209 = vmatprep.subr.mxu0 0.0
    %210 = vmatpush1.msra.mxu0 0.0
    %211 = vmatprep.subr.mxu0 0.0
    %212 = vmatpush1.msra.mxu0 0.0
    %213 = vmatprep.mubr.f32.mxu0 0.0
    %214 = vmatmul.mubr.f32.gmra.mrb[0].mxu0 %v147
    %v215 = vpop.f32.mrb[0].mxu0
    %v216 = vadd.f32 0.0, %v215
    %v217 = vpop.f32.mrb[0].mxu0
    %218 = vdwg.mxu0
    %v219 = vadd.f32 %v145, %v216
    %v220 = vtanh.pop %v219
    %221 = vst.msk [vmem:[#allocation2 + $0x2] sm:$0x3] %vm143, %v220
    %v222 = vld [vmem:[#allocation2 + $0x4] sm:$0x3]
    %v224 = vsel %vm130, %v220, 0
    %226 = vmatprep.subr.mxu0 0.0
    %227 = vmatpush1.msra.mxu0 %v133
    %228 = vmatprep.subr.mxu0 0.0
    %229 = vmatpush1.msra.mxu0 %v134
    %230 = vmatprep.subr.mxu0 0.0
    %231 = vmatpush1.msra.mxu0 %v135
    %232 = vmatprep.subr.mxu0 0.0
    %233 = vmatpush1.msra.mxu0 %v136
    %234 = vmatprep.subr.mxu0 0.0
    %235 = vmatpush1.msra.mxu0 %v137
    %236 = vmatprep.subr.mxu0 0.0
    %237 = vmatpush1.msra.mxu0 %v138
    %238 = vmatprep.subr.mxu0 0.0
    %239 = vmatpush1.msra.mxu0 %v139
    %240 = vmatprep.subr.mxu0 0.0
    %241 = vmatpush1.msra.mxu0 %v140
    %242 = vmatprep.subr.mxu0 0.0
    %243 = vmatpush1.msra.mxu0 0.0
    %244 = vmatprep.subr.mxu0 0.0
    %245 = vmatpush1.msra.mxu0 0.0
    %246 = vmatprep.subr.mxu0 0.0
    %247 = vmatpush1.msra.mxu0 0.0
    %248 = vmatprep.subr.mxu0 0.0
    %249 = vmatpush1.msra.mxu0 0.0
    %250 = vmatprep.subr.mxu0 0.0
    %251 = vmatpush1.msra.mxu0 0.0
    %252 = vmatprep.subr.mxu0 0.0
    %253 = vmatpush1.msra.mxu0 0.0
    %254 = vmatprep.subr.mxu0 0.0
    %255 = vmatpush1.msra.mxu0 0.0
    %256 = vmatprep.subr.mxu0 0.0
    %257 = vmatpush1.msra.mxu0 0.0
    %258 = vmatprep.subr.mxu0 0.0
    %259 = vmatpush1.msra.mxu0 0.0
    %260 = vmatprep.subr.mxu0 0.0
    %261 = vmatpush1.msra.mxu0 0.0
    %262 = vmatprep.subr.mxu0 0.0
    %263 = vmatpush1.msra.mxu0 0.0
    %264 = vmatprep.subr.mxu0 0.0
    %265 = vmatpush1.msra.mxu0 0.0
    %266 = vmatprep.subr.mxu0 0.0
    %267 = vmatpush1.msra.mxu0 0.0
    %268 = vmatprep.subr.mxu0 0.0
    %269 = vmatpush1.msra.mxu0 0.0
    %270 = vmatprep.subr.mxu0 0.0
    %271 = vmatpush1.msra.mxu0 0.0
    %272 = vmatprep.subr.mxu0 0.0
    %273 = vmatpush1.msra.mxu0 0.0
    %274 = vmatprep.subr.mxu0 0.0
    %275 = vmatpush1.msra.mxu0 0.0
    %276 = vmatprep.subr.mxu0 0.0
    %277 = vmatpush1.msra.mxu0 0.0
    %278 = vmatprep.subr.mxu0 0.0
    %279 = vmatpush1.msra.mxu0 0.0
    %280 = vmatprep.subr.mxu0 0.0
    %281 = vmatpush1.msra.mxu0 0.0
    %282 = vmatprep.subr.mxu0 0.0
    %283 = vmatpush1.msra.mxu0 0.0
    %284 = vmatprep.subr.mxu0 0.0
    %285 = vmatpush1.msra.mxu0 0.0
    %286 = vmatprep.subr.mxu0 0.0
    %287 = vmatpush1.msra.mxu0 0.0
    %288 = vmatprep.subr.mxu0 0.0
    %289 = vmatpush1.msra.mxu0 0.0
    %290 = vmatprep.mubr.f32.mxu0 0.0
    %291 = vmatmul.mubr.f32.gmra.mrb[0].mxu0 %v224
    %v292 = vpop.f32.mrb[0].mxu0
    %v293 = vadd.f32 0.0, %v292
    %v294 = vpop.f32.mrb[0].mxu0
    %295 = vdwg.mxu0
    %v296 = vadd.f32 %v222, %v293
    %v297 = vtanh.pop %v296
    %298 = vst.msk [vmem:[#allocation2 + $0x4] sm:$0x3] %vm143, %v297
    %v299 = vld [vmem:[#allocation2 + $0x6] sm:$0x3]
    %v301 = vsel %vm130, %v297, 0
    %303 = vmatprep.subr.mxu0 0.0
    %304 = vmatpush1.msra.mxu0 %v133
    %305 = vmatprep.subr.mxu0 0.0
    %306 = vmatpush1.msra.mxu0 %v134
    %307 = vmatprep.subr.mxu0 0.0
    %308 = vmatpush1.msra.mxu0 %v135
    %309 = vmatprep.subr.mxu0 0.0
    %310 = vmatpush1.msra.mxu0 %v136
    %311 = vmatprep.subr.mxu0 0.0
    %312 = vmatpush1.msra.mxu0 %v137
    %313 = vmatprep.subr.mxu0 0.0
    %314 = vmatpush1.msra.mxu0 %v138
    %315 = vmatprep.subr.mxu0 0.0
    %316 = vmatpush1.msra.mxu0 %v139
    %317 = vmatprep.subr.mxu0 0.0
    %318 = vmatpush1.msra.mxu0 %v140
    %319 = vmatprep.subr.mxu0 0.0
    %320 = vmatpush1.msra.mxu0 0.0
    %321 = vmatprep.subr.mxu0 0.0
    %322 = vmatpush1.msra.mxu0 0.0
    %323 = vmatprep.subr.mxu0 0.0
    %324 = vmatpush1.msra.mxu0 0.0
    %325 = vmatprep.subr.mxu0 0.0
    %326 = vmatpush1.msra.mxu0 0.0
    %327 = vmatprep.subr.mxu0 0.0
    %328 = vmatpush1.msra.mxu0 0.0
    %329 = vmatprep.subr.mxu0 0.0
    %330 = vmatpush1.msra.mxu0 0.0
    %331 = vmatprep.subr.mxu0 0.0
    %332 = vmatpush1.msra.mxu0 0.0
    %333 = vmatprep.subr.mxu0 0.0
    %334 = vmatpush1.msra.mxu0 0.0
    %335 = vmatprep.subr.mxu0 0.0
    %336 = vmatpush1.msra.mxu0 0.0
    %337 = vmatprep.subr.mxu0 0.0
    %338 = vmatpush1.msra.mxu0 0.0
    %339 = vmatprep.subr.mxu0 0.0
    %340 = vmatpush1.msra.mxu0 0.0
    %341 = vmatprep.subr.mxu0 0.0
    %342 = vmatpush1.msra.mxu0 0.0
    %343 = vmatprep.subr.mxu0 0.0
    %344 = vmatpush1.msra.mxu0 0.0
    %345 = vmatprep.subr.mxu0 0.0
    %346 = vmatpush1.msra.mxu0 0.0
    %347 = vmatprep.subr.mxu0 0.0
    %348 = vmatpush1.msra.mxu0 0.0
    %349 = vmatprep.subr.mxu0 0.0
    %350 = vmatpush1.msra.mxu0 0.0
    %351 = vmatprep.subr.mxu0 0.0
    %352 = vmatpush1.msra.mxu0 0.0
    %353 = vmatprep.subr.mxu0 0.0
    %354 = vmatpush1.msra.mxu0 0.0
    %355 = vmatprep.subr.mxu0 0.0
    %356 = vmatpush1.msra.mxu0 0.0
    %357 = vmatprep.subr.mxu0 0.0
    %358 = vmatpush1.msra.mxu0 0.0
    %359 = vmatprep.subr.mxu0 0.0
    %360 = vmatpush1.msra.mxu0 0.0
    %361 = vmatprep.subr.mxu0 0.0
    %362 = vmatpush1.msra.mxu0 0.0
    %363 = vmatprep.subr.mxu0 0.0
    %364 = vmatpush1.msra.mxu0 0.0
    %365 = vmatprep.subr.mxu0 0.0
    %366 = vmatpush1.msra.mxu0 0.0
    %367 = vmatprep.mubr.f32.mxu0 0.0
    %368 = vmatmul.mubr.f32.gmra.mrb[0].mxu0 %v301
    %v369 = vpop.f32.mrb[0].mxu0
    %v370 = vadd.f32 0.0, %v369
    %v371 = vpop.f32.mrb[0].mxu0
    %372 = vdwg.mxu0
    %v373 = vadd.f32 %v299, %v370
    %v374 = vtanh.pop %v373
    %375 = vst.msk [vmem:[#allocation2 + $0x6] sm:$0x3] %vm143, %v374
    %v376 = vld [vmem:[#allocation2 + $0x8] sm:$0x3]
    %v378 = vsel %vm130, %v374, 0
    %380 = vmatprep.subr.mxu0 0.0
    %381 = vmatpush1.msra.mxu0 %v133
    %382 = vmatprep.subr.mxu0 0.0
    %383 = vmatpush1.msra.mxu0 %v134
    %384 = vmatprep.subr.mxu0 0.0
    %385 = vmatpush1.msra.mxu0 %v135
    %386 = vmatprep.subr.mxu0 0.0
    %387 = vmatpush1.msra.mxu0 %v136
    %388 = vmatprep.subr.mxu0 0.0
    %389 = vmatpush1.msra.mxu0 %v137
    %390 = vmatprep.subr.mxu0 0.0
    %391 = vmatpush1.msra.mxu0 %v138
    %392 = vmatprep.subr.mxu0 0.0
    %393 = vmatpush1.msra.mxu0 %v139
    %394 = vmatprep.subr.mxu0 0.0
    %395 = vmatpush1.msra.mxu0 %v140
    %396 = vmatprep.subr.mxu0 0.0
    %397 = vmatpush1.msra.mxu0 0.0
    %398 = vmatprep.subr.mxu0 0.0
    %399 = vmatpush1.msra.mxu0 0.0
    %400 = vmatprep.subr.mxu0 0.0
    %401 = vmatpush1.msra.mxu0 0.0
    %402 = vmatprep.subr.mxu0 0.0
    %403 = vmatpush1.msra.mxu0 0.0
    %404 = vmatprep.subr.mxu0 0.0
    %405 = vmatpush1.msra.mxu0 0.0
    %406 = vmatprep.subr.mxu0 0.0
    %407 = vmatpush1.msra.mxu0 0.0
    %408 = vmatprep.subr.mxu0 0.0
    %409 = vmatpush1.msra.mxu0 0.0
    %410 = vmatprep.subr.mxu0 0.0
    %411 = vmatpush1.msra.mxu0 0.0
    %412 = vmatprep.subr.mxu0 0.0
    %413 = vmatpush1.msra.mxu0 0.0
    %414 = vmatprep.subr.mxu0 0.0
    %415 = vmatpush1.msra.mxu0 0.0
    %416 = vmatprep.subr.mxu0 0.0
    %417 = vmatpush1.msra.mxu0 0.0
    %418 = vmatprep.subr.mxu0 0.0
    %419 = vmatpush1.msra.mxu0 0.0
    %420 = vmatprep.subr.mxu0 0.0
    %421 = vmatpush1.msra.mxu0 0.0
    %422 = vmatprep.subr.mxu0 0.0
    %423 = vmatpush1.msra.mxu0 0.0
    %424 = vmatprep.subr.mxu0 0.0
    %425 = vmatpush1.msra.mxu0 0.0
    %426 = vmatprep.subr.mxu0 0.0
    %427 = vmatpush1.msra.mxu0 0.0
    %428 = vmatprep.subr.mxu0 0.0
    %429 = vmatpush1.msra.mxu0 0.0
    %430 = vmatprep.subr.mxu0 0.0
    %431 = vmatpush1.msra.mxu0 0.0
    %432 = vmatprep.subr.mxu0 0.0
    %433 = vmatpush1.msra.mxu0 0.0
    %434 = vmatprep.subr.mxu0 0.0
    %435 = vmatpush1.msra.mxu0 0.0
    %436 = vmatprep.subr.mxu0 0.0
    %437 = vmatpush1.msra.mxu0 0.0
    %438 = vmatprep.subr.mxu0 0.0
    %439 = vmatpush1.msra.mxu0 0.0
    %440 = vmatprep.subr.mxu0 0.0
    %441 = vmatpush1.msra.mxu0 0.0
    %442 = vmatprep.subr.mxu0 0.0
    %443 = vmatpush1.msra.mxu0 0.0
    %444 = vmatprep.mubr.f32.mxu0 0.0
    %445 = vmatmul.mubr.f32.gmra.mrb[0].mxu0 %v378
    %v446 = vpop.f32.mrb[0].mxu0
    %v447 = vadd.f32 0.0, %v446
    %v448 = vpop.f32.mrb[0].mxu0
    %449 = vdwg.mxu0
    %v450 = vadd.f32 %v376, %v447
    %v451 = vtanh.pop %v450
    %452 = vst.msk [vmem:[#allocation2 + $0x8] sm:$0x3] %vm143, %v451
    %v453 = vld [vmem:[#allocation2 + $0xa] sm:$0x3]
    %v455 = vsel %vm130, %v451, 0
    %457 = vmatprep.subr.mxu0 0.0
    %458 = vmatpush1.msra.mxu0 %v133
    %459 = vmatprep.subr.mxu0 0.0
    %460 = vmatpush1.msra.mxu0 %v134
    %461 = vmatprep.subr.mxu0 0.0
    %462 = vmatpush1.msra.mxu0 %v135
    %463 = vmatprep.subr.mxu0 0.0
    %464 = vmatpush1.msra.mxu0 %v136
    %465 = vmatprep.subr.mxu0 0.0
    %466 = vmatpush1.msra.mxu0 %v137
    %467 = vmatprep.subr.mxu0 0.0
    %468 = vmatpush1.msra.mxu0 %v138
    %469 = vmatprep.subr.mxu0 0.0
    %470 = vmatpush1.msra.mxu0 %v139
    %471 = vmatprep.subr.mxu0 0.0
    %472 = vmatpush1.msra.mxu0 %v140
    %473 = vmatprep.subr.mxu0 0.0
    %474 = vmatpush1.msra.mxu0 0.0
    %475 = vmatprep.subr.mxu0 0.0
    %476 = vmatpush1.msra.mxu0 0.0
    %477 = vmatprep.subr.mxu0 0.0
    %478 = vmatpush1.msra.mxu0 0.0
    %479 = vmatprep.subr.mxu0 0.0
    %480 = vmatpush1.msra.mxu0 0.0
    %481 = vmatprep.subr.mxu0 0.0
    %482 = vmatpush1.msra.mxu0 0.0
    %483 = vmatprep.subr.mxu0 0.0
    %484 = vmatpush1.msra.mxu0 0.0
    %485 = vmatprep.subr.mxu0 0.0
    %486 = vmatpush1.msra.mxu0 0.0
    %487 = vmatprep.subr.mxu0 0.0
    %488 = vmatpush1.msra.mxu0 0.0
    %489 = vmatprep.subr.mxu0 0.0
    %490 = vmatpush1.msra.mxu0 0.0
    %491 = vmatprep.subr.mxu0 0.0
    %492 = vmatpush1.msra.mxu0 0.0
    %493 = vmatprep.subr.mxu0 0.0
    %494 = vmatpush1.msra.mxu0 0.0
    %495 = vmatprep.subr.mxu0 0.0
    %496 = vmatpush1.msra.mxu0 0.0
    %497 = vmatprep.subr.mxu0 0.0
    %498 = vmatpush1.msra.mxu0 0.0
    %499 = vmatprep.subr.mxu0 0.0
    %500 = vmatpush1.msra.mxu0 0.0
    %501 = vmatprep.subr.mxu0 0.0
    %502 = vmatpush1.msra.mxu0 0.0
    %503 = vmatprep.subr.mxu0 0.0
    %504 = vmatpush1.msra.mxu0 0.0
    %505 = vmatprep.subr.mxu0 0.0
    %506 = vmatpush1.msra.mxu0 0.0
    %507 = vmatprep.subr.mxu0 0.0
    %508 = vmatpush1.msra.mxu0 0.0
    %509 = vmatprep.subr.mxu0 0.0
    %510 = vmatpush1.msra.mxu0 0.0
    %511 = vmatprep.subr.mxu0 0.0
    %512 = vmatpush1.msra.mxu0 0.0
    %513 = vmatprep.subr.mxu0 0.0
    %514 = vmatpush1.msra.mxu0 0.0
    %515 = vmatprep.subr.mxu0 0.0
    %516 = vmatpush1.msra.mxu0 0.0
    %517 = vmatprep.subr.mxu0 0.0
    %518 = vmatpush1.msra.mxu0 0.0
    %519 = vmatprep.subr.mxu0 0.0
    %520 = vmatpush1.msra.mxu0 0.0
    %521 = vmatprep.mubr.f32.mxu0 0.0
    %522 = vmatmul.mubr.f32.gmra.mrb[0].mxu0 %v455
    %v523 = vpop.f32.mrb[0].mxu0
    %v524 = vadd.f32 0.0, %v523
    %v525 = vpop.f32.mrb[0].mxu0
    %526 = vdwg.mxu0
    %v527 = vadd.f32 %v453, %v524
    %v528 = vtanh.pop %v527
    %529 = vst.msk [vmem:[#allocation2 + $0xa] sm:$0x3] %vm143, %v528
    %v530 = vld [vmem:[#allocation2 + $0xc] sm:$0x3]
    %v532 = vsel %vm130, %v528, 0
    %534 = vmatprep.subr.mxu0 0.0
    %535 = vmatpush1.msra.mxu0 %v133
    %536 = vmatprep.subr.mxu0 0.0
    %537 = vmatpush1.msra.mxu0 %v134
    %538 = vmatprep.subr.mxu0 0.0
    %539 = vmatpush1.msra.mxu0 %v135
    %540 = vmatprep.subr.mxu0 0.0
    %541 = vmatpush1.msra.mxu0 %v136
    %542 = vmatprep.subr.mxu0 0.0
    %543 = vmatpush1.msra.mxu0 %v137
    %544 = vmatprep.subr.mxu0 0.0
    %545 = vmatpush1.msra.mxu0 %v138
    %546 = vmatprep.subr.mxu0 0.0
    %547 = vmatpush1.msra.mxu0 %v139
    %548 = vmatprep.subr.mxu0 0.0
    %549 = vmatpush1.msra.mxu0 %v140
    %550 = vmatprep.subr.mxu0 0.0
    %551 = vmatpush1.msra.mxu0 0.0
    %552 = vmatprep.subr.mxu0 0.0
    %553 = vmatpush1.msra.mxu0 0.0
    %554 = vmatprep.subr.mxu0 0.0
    %555 = vmatpush1.msra.mxu0 0.0
    %556 = vmatprep.subr.mxu0 0.0
    %557 = vmatpush1.msra.mxu0 0.0
    %558 = vmatprep.subr.mxu0 0.0
    %559 = vmatpush1.msra.mxu0 0.0
    %560 = vmatprep.subr.mxu0 0.0
    %561 = vmatpush1.msra.mxu0 0.0
    %562 = vmatprep.subr.mxu0 0.0
    %563 = vmatpush1.msra.mxu0 0.0
    %564 = vmatprep.subr.mxu0 0.0
    %565 = vmatpush1.msra.mxu0 0.0
    %566 = vmatprep.subr.mxu0 0.0
    %567 = vmatpush1.msra.mxu0 0.0
    %568 = vmatprep.subr.mxu0 0.0
    %569 = vmatpush1.msra.mxu0 0.0
    %570 = vmatprep.subr.mxu0 0.0
    %571 = vmatpush1.msra.mxu0 0.0
    %572 = vmatprep.subr.mxu0 0.0
    %573 = vmatpush1.msra.mxu0 0.0
    %574 = vmatprep.subr.mxu0 0.0
    %575 = vmatpush1.msra.mxu0 0.0
    %576 = vmatprep.subr.mxu0 0.0
    %577 = vmatpush1.msra.mxu0 0.0
    %578 = vmatprep.subr.mxu0 0.0
    %579 = vmatpush1.msra.mxu0 0.0
    %580 = vmatprep.subr.mxu0 0.0
    %581 = vmatpush1.msra.mxu0 0.0
    %582 = vmatprep.subr.mxu0 0.0
    %583 = vmatpush1.msra.mxu0 0.0
    %584 = vmatprep.subr.mxu0 0.0
    %585 = vmatpush1.msra.mxu0 0.0
    %586 = vmatprep.subr.mxu0 0.0
    %587 = vmatpush1.msra.mxu0 0.0
    %588 = vmatprep.subr.mxu0 0.0
    %589 = vmatpush1.msra.mxu0 0.0
    %590 = vmatprep.subr.mxu0 0.0
    %591 = vmatpush1.msra.mxu0 0.0
    %592 = vmatprep.subr.mxu0 0.0
    %593 = vmatpush1.msra.mxu0 0.0
    %594 = vmatprep.subr.mxu0 0.0
    %595 = vmatpush1.msra.mxu0 0.0
    %596 = vmatprep.subr.mxu0 0.0
    %597 = vmatpush1.msra.mxu0 0.0
    %598 = vmatprep.mubr.f32.mxu0 0.0
    %599 = vmatmul.mubr.f32.gmra.mrb[0].mxu0 %v532
    %v600 = vpop.f32.mrb[0].mxu0
    %v601 = vadd.f32 0.0, %v600
    %v602 = vpop.f32.mrb[0].mxu0
    %603 = vdwg.mxu0
    %v604 = vadd.f32 %v530, %v601
    %v605 = vtanh.pop %v604
    %606 = vst.msk [vmem:[#allocation2 + $0xc] sm:$0x3] %vm143, %v605
    %v607 = vld [vmem:[#allocation2 + $0xe] sm:$0x3]
    %v609 = vsel %vm130, %v605, 0
    %611 = vmatprep.subr.mxu0 0.0
    %612 = vmatpush1.msra.mxu0 %v133
    %613 = vmatprep.subr.mxu0 0.0
    %614 = vmatpush1.msra.mxu0 %v134
    %615 = vmatprep.subr.mxu0 0.0
    %616 = vmatpush1.msra.mxu0 %v135
    %617 = vmatprep.subr.mxu0 0.0
    %618 = vmatpush1.msra.mxu0 %v136
    %619 = vmatprep.subr.mxu0 0.0
    %620 = vmatpush1.msra.mxu0 %v137
    %621 = vmatprep.subr.mxu0 0.0
    %622 = vmatpush1.msra.mxu0 %v138
    %623 = vmatprep.subr.mxu0 0.0
    %624 = vmatpush1.msra.mxu0 %v139
    %625 = vmatprep.subr.mxu0 0.0
    %626 = vmatpush1.msra.mxu0 %v140
    %627 = vmatprep.subr.mxu0 0.0
    %628 = vmatpush1.msra.mxu0 0.0
    %629 = vmatprep.subr.mxu0 0.0
    %630 = vmatpush1.msra.mxu0 0.0
    %631 = vmatprep.subr.mxu0 0.0
    %632 = vmatpush1.msra.mxu0 0.0
    %633 = vmatprep.subr.mxu0 0.0
    %634 = vmatpush1.msra.mxu0 0.0
    %635 = vmatprep.subr.mxu0 0.0
    %636 = vmatpush1.msra.mxu0 0.0
    %637 = vmatprep.subr.mxu0 0.0
    %638 = vmatpush1.msra.mxu0 0.0
    %639 = vmatprep.subr.mxu0 0.0
    %640 = vmatpush1.msra.mxu0 0.0
    %641 = vmatprep.subr.mxu0 0.0
    %642 = vmatpush1.msra.mxu0 0.0
    %643 = vmatprep.subr.mxu0 0.0
    %644 = vmatpush1.msra.mxu0 0.0
    %645 = vmatprep.subr.mxu0 0.0
    %646 = vmatpush1.msra.mxu0 0.0
    %647 = vmatprep.subr.mxu0 0.0
    %648 = vmatpush1.msra.mxu0 0.0
    %649 = vmatprep.subr.mxu0 0.0
    %650 = vmatpush1.msra.mxu0 0.0
    %651 = vmatprep.subr.mxu0 0.0
    %652 = vmatpush1.msra.mxu0 0.0
    %653 = vmatprep.subr.mxu0 0.0
    %654 = vmatpush1.msra.mxu0 0.0
    %655 = vmatprep.subr.mxu0 0.0
    %656 = vmatpush1.msra.mxu0 0.0
    %657 = vmatprep.subr.mxu0 0.0
    %658 = vmatpush1.msra.mxu0 0.0
    %659 = vmatprep.subr.mxu0 0.0
    %660 = vmatpush1.msra.mxu0 0.0
    %661 = vmatprep.subr.mxu0 0.0
    %662 = vmatpush1.msra.mxu0 0.0
    %663 = vmatprep.subr.mxu0 0.0
    %664 = vmatpush1.msra.mxu0 0.0
    %665 = vmatprep.subr.mxu0 0.0
    %666 = vmatpush1.msra.mxu0 0.0
    %667 = vmatprep.subr.mxu0 0.0
    %668 = vmatpush1.msra.mxu0 0.0
    %669 = vmatprep.subr.mxu0 0.0
    %670 = vmatpush1.msra.mxu0 0.0
    %671 = vmatprep.subr.mxu0 0.0
    %672 = vmatpush1.msra.mxu0 0.0
    %673 = vmatprep.subr.mxu0 0.0
    %674 = vmatpush1.msra.mxu0 0.0
    %675 = vmatprep.mubr.f32.mxu0 0.0
    %676 = vmatmul.mubr.f32.gmra.mrb[0].mxu0 %v609
    %v677 = vpop.f32.mrb[0].mxu0
    %v678 = vadd.f32 0.0, %v677
    %v679 = vpop.f32.mrb[0].mxu0
    %680 = vdwg.mxu0
    %v681 = vadd.f32 %v607, %v678
    %v682 = vtanh.pop %v681
    %683 = vst.msk [vmem:[#allocation2 + $0xe] sm:$0x3] %vm143, %v682
    %684 = vst.msk [vmem:[#allocation4] sm:$0x3] %vm143, %v682
    %v685 = vld [vmem:[#allocation2] sm:$0xff]
    %v686 = vld [vmem:[#allocation2 + $0x8] sm:$0xff]
    %v687 = vmax.f32 %v685, 0.0
    %v688 = vmax.f32 %v686, 0.0
    %v689 = vld [vmem:[%s4] sm:$0xff]
    %v690 = vld [vmem:[%s4 + $0x8] sm:$0xff]
    %v691 = vld [vmem:[%s4 + $0x10] sm:$0xff]
    %v692 = vld [vmem:[%s4 + $0x18] sm:$0xff]
    %v693 = vld [vmem:[%s4 + $0x20] sm:$0xff]
    %v694 = vld [vmem:[%s4 + $0x28] sm:$0xff]
    %v695 = vld [vmem:[%s4 + $0x30] sm:$0xff]
    %v696 = vld [vmem:[%s4 + $0x38] sm:$0xff]
    %v697 = vld [vmem:[%s5] sm:$0x1]
    %v699 = vlaneseq
    %v700 = vshrl.u32 %v699, 7
    %v701 = vsub.s32 0, %v700
    %v702 = vrot.slane %v697, %v701
    %v705 = vsel %vm130, %v687, 0
    %v708 = vsel %vm130, %v688, 0
    %710 = vmatprep.subr.mxu0 0.0
    %711 = vmatpush1.msra.mxu0 %v689
    %712 = vmatprep.subr.mxu0 0.0
    %713 = vmatpush1.msra.mxu0 %v690
    %714 = vmatprep.subr.mxu0 0.0
    %715 = vmatpush1.msra.mxu0 %v691
    %716 = vmatprep.subr.mxu0 0.0
    %717 = vmatpush1.msra.mxu0 %v692
    %718 = vmatprep.subr.mxu0 0.0
    %719 = vmatpush1.msra.mxu0 %v693
    %720 = vmatprep.subr.mxu0 0.0
    %721 = vmatpush1.msra.mxu0 %v694
    %722 = vmatprep.subr.mxu0 0.0
    %723 = vmatpush1.msra.mxu0 %v695
    %724 = vmatprep.subr.mxu0 0.0
    %725 = vmatpush1.msra.mxu0 %v696
    %726 = vmatprep.subr.mxu0 0.0
    %727 = vmatpush1.msra.mxu0 0.0
    %728 = vmatprep.subr.mxu0 0.0
    %729 = vmatpush1.msra.mxu0 0.0
    %730 = vmatprep.subr.mxu0 0.0
    %731 = vmatpush1.msra.mxu0 0.0
    %732 = vmatprep.subr.mxu0 0.0
    %733 = vmatpush1.msra.mxu0 0.0
    %734 = vmatprep.subr.mxu0 0.0
    %735 = vmatpush1.msra.mxu0 0.0
    %736 = vmatprep.subr.mxu0 0.0
    %737 = vmatpush1.msra.mxu0 0.0
    %738 = vmatprep.subr.mxu0 0.0
    %739 = vmatpush1.msra.mxu0 0.0
    %740 = vmatprep.subr.mxu0 0.0
    %741 = vmatpush1.msra.mxu0 0.0
    %742 = vmatprep.subr.mxu0 0.0
    %743 = vmatpush1.msra.mxu0 0.0
    %744 = vmatprep.subr.mxu0 0.0
    %745 = vmatpush1.msra.mxu0 0.0
    %746 = vmatprep.subr.mxu0 0.0
    %747 = vmatpush1.msra.mxu0 0.0
    %748 = vmatprep.subr.mxu0 0.0
    %749 = vmatpush1.msra.mxu0 0.0
    %750 = vmatprep.subr.mxu0 0.0
    %751 = vmatpush1.msra.mxu0 0.0
    %752 = vmatprep.subr.mxu0 0.0
    %753 = vmatpush1.msra.mxu0 0.0
    %754 = vmatprep.subr.mxu0 0.0
    %755 = vmatpush1.msra.mxu0 0.0
    %756 = vmatprep.subr.mxu0 0.0
    %757 = vmatpush1.msra.mxu0 0.0
    %758 = vmatprep.subr.mxu0 0.0
    %759 = vmatpush1.msra.mxu0 0.0
    %760 = vmatprep.subr.mxu0 0.0
    %761 = vmatpush1.msra.mxu0 0.0
    %762 = vmatprep.subr.mxu0 0.0
    %763 = vmatpush1.msra.mxu0 0.0
    %764 = vmatprep.subr.mxu0 0.0
    %765 = vmatpush1.msra.mxu0 0.0
    %766 = vmatprep.subr.mxu0 0.0
    %767 = vmatpush1.msra.mxu0 0.0
    %768 = vmatprep.subr.mxu0 0.0
    %769 = vmatpush1.msra.mxu0 0.0
    %770 = vmatprep.subr.mxu0 0.0
    %771 = vmatpush1.msra.mxu0 0.0
    %772 = vmatprep.subr.mxu0 0.0
    %773 = vmatpush1.msra.mxu0 0.0
    %774 = vmatprep.mubr.f32.mxu0 0.0
    %775 = vmatmul.mubr.f32.gmra.mrb[0].mxu0 %v705
    %v776 = vpop.f32.mrb[0].mxu0
    %v777 = vadd.f32 %v702, %v776
    %v778 = vpop.f32.mrb[0].mxu0
    %779 = vmatprep.mubr.f32.mxu0 0.0
    %780 = vmatmul.mubr.f32.gmra.mrb[0].mxu0 %v708
    %v781 = vpop.f32.mrb[0].mxu0
    %v782 = vadd.f32 %v702, %v781
    %v783 = vpop.f32.mrb[0].mxu0
    %784 = vdwg.mxu0
    %v785 = vmax.f32 %v777, 0.0
    %v786 = vmax.f32 %v782, 0.0
    %v787 = vld [vmem:[%s6] sm:$0x1]
    %v788 = vld [vmem:[#allocation3] sm:$0x1]
    %790 = vset.pattern.permute.xlu0 0
    %791 = vperm.xlu0 %790, %v788
    %v792 = vpop.permute.xlu0 %791
    %v794 = vlaneseq
    %v795 = vshrl.u32 %v794, 7
    %v796 = vsub.s32 0, %v795
    %v797 = vrot.slane %v792, %v796
    %v799 = vsel %vm130, %v787, 0
    %v802 = vsel %vm130, %v785, 0
    %v805 = vsel %vm130, %v786, 0
    %807 = vmatprep.subr.mxu0 0.0
    %808 = vmatpush1.xpose.msra.mxu0 %v802
    %809 = vmatprep.subr.mxu0 0.0
    %810 = vmatpush1.xpose.msra.mxu0 %v805
    %811 = vmatprep.subr.mxu0 0.0
    %812 = vmatpush1.xpose.msra.mxu0 0.0
    %813 = vmatprep.subr.mxu0 0.0
    %814 = vmatpush1.xpose.msra.mxu0 0.0
    %815 = vmatprep.subr.mxu0 0.0
    %816 = vmatpush1.xpose.msra.mxu0 0.0
    %817 = vmatprep.subr.mxu0 0.0
    %818 = vmatpush1.xpose.msra.mxu0 0.0
    %819 = vmatprep.subr.mxu0 0.0
    %820 = vmatpush1.xpose.msra.mxu0 0.0
    %821 = vmatprep.subr.mxu0 0.0
    %822 = vmatpush1.xpose.msra.mxu0 0.0
    %823 = vmatprep.subr.mxu0 0.0
    %824 = vmatpush1.xpose.msra.mxu0 0.0
    %825 = vmatprep.subr.mxu0 0.0
    %826 = vmatpush1.xpose.msra.mxu0 0.0
    %827 = vmatprep.subr.mxu0 0.0
    %828 = vmatpush1.xpose.msra.mxu0 0.0
    %829 = vmatprep.subr.mxu0 0.0
    %830 = vmatpush1.xpose.msra.mxu0 0.0
    %831 = vmatprep.subr.mxu0 0.0
    %832 = vmatpush1.xpose.msra.mxu0 0.0
    %833 = vmatprep.subr.mxu0 0.0
    %834 = vmatpush1.xpose.msra.mxu0 0.0
    %835 = vmatprep.subr.mxu0 0.0
    %836 = vmatpush1.xpose.msra.mxu0 0.0
    %837 = vmatprep.subr.mxu0 0.0
    %838 = vmatpush1.xpose.msra.mxu0 0.0
    %839 = vmatprep.subr.mxu0 0.0
    %840 = vmatpush1.xpose.msra.mxu0 0.0
    %841 = vmatprep.subr.mxu0 0.0
    %842 = vmatpush1.xpose.msra.mxu0 0.0
    %843 = vmatprep.subr.mxu0 0.0
    %844 = vmatpush1.xpose.msra.mxu0 0.0
    %845 = vmatprep.subr.mxu0 0.0
    %846 = vmatpush1.xpose.msra.mxu0 0.0
    %847 = vmatprep.subr.mxu0 0.0
    %848 = vmatpush1.xpose.msra.mxu0 0.0
    %849 = vmatprep.subr.mxu0 0.0
    %850 = vmatpush1.xpose.msra.mxu0 0.0
    %851 = vmatprep.subr.mxu0 0.0
    %852 = vmatpush1.xpose.msra.mxu0 0.0
    %853 = vmatprep.subr.mxu0 0.0
    %854 = vmatpush1.xpose.msra.mxu0 0.0
    %855 = vmatprep.subr.mxu0 0.0
    %856 = vmatpush1.xpose.msra.mxu0 0.0
    %857 = vmatprep.subr.mxu0 0.0
    %858 = vmatpush1.xpose.msra.mxu0 0.0
    %859 = vmatprep.subr.mxu0 0.0
    %860 = vmatpush1.xpose.msra.mxu0 0.0
    %861 = vmatprep.subr.mxu0 0.0
    %862 = vmatpush1.xpose.msra.mxu0 0.0
    %863 = vmatprep.subr.mxu0 0.0
    %864 = vmatpush1.xpose.msra.mxu0 0.0
    %865 = vmatprep.subr.mxu0 0.0
    %866 = vmatpush1.xpose.msra.mxu0 0.0
    %867 = vmatprep.subr.mxu0 0.0
    %868 = vmatpush1.xpose.msra.mxu0 0.0
    %869 = vmatprep.subr.mxu0 0.0
    %870 = vmatpush1.xpose.msra.mxu0 0.0
    %871 = vmatprep.mubr.f32.mxu0 0.0
    %872 = vmatmul.mubr.f32.gmra.mrb[0].mxu0 %v799
    %v873 = vpop.f32.mrb[0].mxu0
    %v874 = vadd.f32 %v797, %v873
    %v875 = vpop.f32.mrb[0].mxu0
    %876 = vdwg.mxu0
    %v877 = vxor.u32 %v874, 2147483648
    %v878 = vmul.f32 %v877, 1.442695
    %v879 = vpow.pop %v878
    %v880 = vadd.f32 %v879, 1.0
    %v881 = vrcp.pop %v880
    %v882 = vmul.f32 1.0, %v881
    %vm883 = vcmask 122880
    %884 = vst.msk [vmem:[%s8] sm:$0x1] %vm883, %v882
    // Predicated region
    $region34: #{vanilla_rnn_forward.1} parent=1 // pred_check
      _
    $region35: #{vanilla_rnn_forward.1} parent=1 // pred_check_branch
      %886 = sbr.rel (0) target = $region37
    $region36: #{vanilla_rnn_forward.1} parent=1 // pred_region
      _
    $region37: #{vanilla_rnn_forward.1} parent=1 // pred_fallthru
      _
    // Predicated region
    $region38: #{vanilla_rnn_forward.1} parent=1 // pred_check
      _
    $region39: #{vanilla_rnn_forward.1} parent=1 // pred_check_branch
      %888 = sbr.rel (0) target = $region41
    $region40: #{vanilla_rnn_forward.1} parent=1 // pred_region
      %s890 = ssub.s32 32, 32
      %891 = vsyncadd [#allocation5], %s890
      %s893 = sshll.u32 [#allocation4], 4
      %s894 = int_to_ptr.vmem [resolvable:$true] %s893
      %896 = dma.vmem_to_hbm [thread:$0]  %s894, 32, %s9, [#allocation5]
    $region41: #{vanilla_rnn_forward.1} parent=1 // pred_fallthru
      _
    // Predicated region
    $region42: #{vanilla_rnn_forward.1} parent=1 // pred_check
      _
    $region43: #{vanilla_rnn_forward.1} parent=1 // pred_check_branch
      %898 = sbr.rel (0) target = $region45
    $region44: #{vanilla_rnn_forward.1} parent=1 // pred_region
      _
    $region45: #{vanilla_rnn_forward.1} parent=1 // pred_fallthru
      _
    // Predicated region
    $region46: #{vanilla_rnn_forward.1} parent=1 // pred_check
      _
    $region47: #{vanilla_rnn_forward.1} parent=1 // pred_check_branch
      %900 = sbr.rel (0) target = $region49
    $region48: #{vanilla_rnn_forward.1} parent=1 // pred_region
      %901 = dma.done [#allocation5], 32
    $region49: #{vanilla_rnn_forward.1} parent=1 // pred_fallthru
      _
    %902 = vsyncpa [#allocation5], 1

</llo_original>
